<compile_context>
chip_gen: v6e
topology: v6e:2x2x1
jax: 0.10.0
libtpu: 0.0.40
codegen_flags: <defaults>
</compile_context>

<pallas_src>
import numpy as np
import jax
import jax.numpy as jnp
from jax.experimental import pallas as pl
from jax.experimental.pallas import tpu as pltpu


def _vmem_specs(n):
    return [pl.BlockSpec(memory_space=pltpu.MemorySpace.VMEM) for _ in range(n)]


def _project_mlp(x, w1, b1, g, beta, w2, b2):
    """Conv1d(k=1) -> BatchNorm1d (training batch stats, L==1) -> ReLU -> Conv1d(k=1).

    Matmuls run in bf16 on the MXU with f32 accumulation; BN / bias / ReLU
    stay in f32. BN uses biased variance + eps=1e-5 (PyTorch train mode).
    """
    h = jnp.dot(x.astype(jnp.bfloat16), w1.astype(jnp.bfloat16),
                preferred_element_type=jnp.float32) + b1
    mean = jnp.mean(h, axis=0, keepdims=True)
    var = jnp.mean((h - mean) ** 2, axis=0, keepdims=True)
    h = (h - mean) * jax.lax.rsqrt(var + 1e-5)
    h = h * g + beta
    h = jnp.maximum(h, 0.0)
    return jnp.dot(h.astype(jnp.bfloat16), w2.astype(jnp.bfloat16),
                   preferred_element_type=jnp.float32) + b2


def _l2_normalize(x):
    # F.normalize(dim=-1, eps=1e-12): x / max(||x||, 1e-12)
    #   == x * rsqrt(max(||x||^2, 1e-24))   (single EUP rsqrt, no divide)
    ssq = jnp.sum(x * x, axis=-1, keepdims=True)
    return x * jax.lax.rsqrt(jnp.maximum(ssq, 1e-24))


# ----------------------------------------------------------------------------
# Fused kernel: ProjectMLP(img) + ProjectMLP(text) + symmetric CLIP CE loss.
# ----------------------------------------------------------------------------
def fused_forward_kernel(scale_ref,                                   # SMEM (1,1)
                         img_feat_ref, txt_feat_ref,                  # VMEM [B, Din_*]
                         iw1_ref, ib1_ref, ig_ref, ibeta_ref, iw2_ref, ib2_ref,
                         tw1_ref, tb1_ref, tg_ref, tbeta_ref, tw2_ref, tb2_ref,
                         loss_ref):                                   # VMEM [1,1]
    # --- ProjectMLP heads (intermediates stay in VMEM/vregs) ---
    image_x = _project_mlp(img_feat_ref[...], iw1_ref[...], ib1_ref[...],
                           ig_ref[...], ibeta_ref[...], iw2_ref[...], ib2_ref[...])
    text_x = _project_mlp(txt_feat_ref[...], tw1_ref[...], tb1_ref[...],
                          tg_ref[...], tbeta_ref[...], tw2_ref[...], tb2_ref[...])

    # --- contrastive loss (world_size == 1, labels == arange(B)) ---
    img_n = _l2_normalize(image_x)                                    # [B, D]
    txt_n = _l2_normalize(text_x)                                     # [B, D]

    scale = scale_ref[0, 0]                                           # scalar (SMEM)
    img_s = img_n * scale                                             # fold scale into [B,D]
    txt_s = txt_n * scale

    # Diagonal of both logits matrices (they are transposes of each other):
    # diag[i] = scale * <img_n[i], txt_n[i]>  -- no BxB eye mask.
    diag = jnp.sum(img_s * txt_n, axis=-1, keepdims=True)             # [B, 1]

    # logits_per_img = scale * img_n @ txt_n.T ; row-wise (lane-axis) LSE.
    logits_img = jax.lax.dot_general(
        img_s.astype(jnp.bfloat16), txt_n.astype(jnp.bfloat16),
        dimension_numbers=(((1,), (1,)), ((), ())),
        preferred_element_type=jnp.float32)                           # [B, B]
    m_i = jnp.max(logits_img, axis=-1, keepdims=True)
    lse_i = jnp.log(jnp.sum(jnp.exp(logits_img - m_i), axis=-1, keepdims=True)) + m_i

    # logits_per_text = scale * txt_n @ img_n.T via a second small MXU matmul,
    # so this CE direction also uses lane-axis reductions (no axis=0 / XLU
    # sublane reductions over the BxB matrix).
    logits_txt = jax.lax.dot_general(
        txt_s.astype(jnp.bfloat16), img_n.astype(jnp.bfloat16),
        dimension_numbers=(((1,), (1,)), ((), ())),
        preferred_element_type=jnp.float32)                           # [B, B]
    m_t = jnp.max(logits_txt, axis=-1, keepdims=True)
    lse_t = jnp.log(jnp.sum(jnp.exp(logits_txt - m_t), axis=-1, keepdims=True)) + m_t

    B = logits_img.shape[0]
    loss_img = jnp.sum(lse_i - diag, axis=0, keepdims=True) / B       # [1, 1]
    loss_txt = jnp.sum(lse_t - diag, axis=0, keepdims=True) / B       # [1, 1]
    loss_ref[...] = 0.5 * (loss_img + loss_txt)


def fused_forward(img_feat, txt_feat, img_params, txt_params, scale):
    return pl.pallas_call(
        fused_forward_kernel,
        out_shape=jax.ShapeDtypeStruct((1, 1), jnp.float32),
        in_specs=[pl.BlockSpec(memory_space=pltpu.MemorySpace.SMEM)] + _vmem_specs(14),
        out_specs=pl.BlockSpec(memory_space=pltpu.MemorySpace.VMEM),
    )(scale, img_feat, txt_feat, *img_params, *txt_params)


# ----------------------------------------------------------------------------
# Module wrapper with deterministic parameter initialization.
# ----------------------------------------------------------------------------
class MultiLabelContrastivePallas:
    def __init__(self, key, img_in_dim, img_width, vocab_size, text_width,
                 inner_dim=64, output_dim=32, contrast_temperature=0.07):
        keys = jax.random.split(key, 8)
        s = 0.02
        # TODO(synk): img_encoder / text_encoder come from external MODELS.build
        # configs (GroupViT / TextTransformer); deterministic linear stand-ins used.
        self.w_img_enc = jax.random.normal(keys[0], (img_in_dim, img_width), jnp.float32) * s
        self.emb = jax.random.normal(keys[1], (vocab_size, text_width), jnp.float32) * s
        self.w_txt_enc = jax.random.normal(keys[2], (text_width, text_width), jnp.float32) * s

        def proj_params(k, din):
            k1, k2, k3, k4 = jax.random.split(k, 4)
            w1 = jax.random.normal(k1, (din, inner_dim), jnp.float32) * s
            b1 = jax.random.normal(k2, (1, inner_dim), jnp.float32) * s
            g = jnp.ones((1, inner_dim), jnp.float32)      # BN gamma init
            beta = jnp.zeros((1, inner_dim), jnp.float32)  # BN beta init
            w2 = jax.random.normal(k3, (inner_dim, output_dim), jnp.float32) * s
            b2 = jax.random.normal(k4, (1, output_dim), jnp.float32) * s
            return (w1, b1, g, beta, w2, b2)

        self.img_proj_params = proj_params(keys[3], img_width)
        self.text_proj_params = proj_params(keys[4], text_width)
        self.logit_scale = jnp.float32(np.log(1.0 / contrast_temperature))

    def __call__(self, image, text):
        B = image.shape[0]
        # stand-in encoders (plain JAX glue; see TODO above)
        img_feat = image.reshape(B, -1).astype(jnp.float32) @ self.w_img_enc   # [B, img_width]
        txt_feat = jnp.mean(self.emb[text], axis=1) @ self.w_txt_enc           # [B, text_width]

        # logit_scale = clamp(exp(param), max=100), passed to the kernel via SMEM
        scale = jnp.minimum(jnp.exp(self.logit_scale), jnp.float32(100.0)).reshape(1, 1)

        # Fused Pallas kernel: both ProjectMLP heads + symmetric contrastive CE.
        loss = fused_forward(img_feat, txt_feat,
                             self.img_proj_params, self.text_proj_params, scale)  # [1,1]
        return {'loss': loss[0, 0]}


if __name__ == "__main__":
    key = jax.random.PRNGKey(0)
    k_model, k_img, k_txt = jax.random.split(key, 3)

    B, C, H, W = 2, 4, 16, 16         # image: NCHW
    L, vocab = 8, 50                  # text tokens

    image = jax.random.normal(k_img, (B, C, H, W), jnp.float32)
    text = jax.random.randint(k_txt, (B, L), 0, vocab, dtype=jnp.int32)

    model = MultiLabelContrastivePallas(
        k_model, img_in_dim=C * H * W, img_width=32, vocab_size=vocab, text_width=32,
        inner_dim=64, output_dim=32)

    out = model(image, text)
    jax.block_until_ready(out['loss'])
    print("KERNEL_OK")
</pallas_src>

<mosaic_0001>
module attributes {stable_mosaic.version = 11 : i64} {
  func.func @fused_forward_kernel(%arg0: memref<1x1xf32, #tpu.memory_space<smem>>, %arg1: memref<2x32xf32, #tpu.memory_space<vmem>>, %arg2: memref<2x32xf32, #tpu.memory_space<vmem>>, %arg3: memref<32x64xf32, #tpu.memory_space<vmem>>, %arg4: memref<1x64xf32, #tpu.memory_space<vmem>>, %arg5: memref<1x64xf32, #tpu.memory_space<vmem>>, %arg6: memref<1x64xf32, #tpu.memory_space<vmem>>, %arg7: memref<64x32xf32, #tpu.memory_space<vmem>>, %arg8: memref<1x32xf32, #tpu.memory_space<vmem>>, %arg9: memref<32x64xf32, #tpu.memory_space<vmem>>, %arg10: memref<1x64xf32, #tpu.memory_space<vmem>>, %arg11: memref<1x64xf32, #tpu.memory_space<vmem>>, %arg12: memref<1x64xf32, #tpu.memory_space<vmem>>, %arg13: memref<64x32xf32, #tpu.memory_space<vmem>>, %arg14: memref<1x32xf32, #tpu.memory_space<vmem>>, %arg15: memref<1x1xf32, #tpu.memory_space<vmem>>) attributes {dimension_semantics = [], scalar_prefetch = 0 : i64, scratch_operands = 0 : i64, tpu.core_type = #tpu.core_type<tc>} {
    %c0 = arith.constant 0 : index
    %c0_0 = arith.constant 0 : index
    %0 = vector.load %arg1[%c0, %c0_0] : memref<2x32xf32, #tpu.memory_space<vmem>>, vector<2x32xf32>
    %c0_1 = arith.constant 0 : index
    %c0_2 = arith.constant 0 : index
    %1 = vector.load %arg3[%c0_1, %c0_2] : memref<32x64xf32, #tpu.memory_space<vmem>>, vector<32x64xf32>
    %c0_3 = arith.constant 0 : index
    %c0_4 = arith.constant 0 : index
    %2 = vector.load %arg4[%c0_3, %c0_4] : memref<1x64xf32, #tpu.memory_space<vmem>>, vector<1x64xf32>
    %c0_5 = arith.constant 0 : index
    %c0_6 = arith.constant 0 : index
    %3 = vector.load %arg5[%c0_5, %c0_6] : memref<1x64xf32, #tpu.memory_space<vmem>>, vector<1x64xf32>
    %c0_7 = arith.constant 0 : index
    %c0_8 = arith.constant 0 : index
    %4 = vector.load %arg6[%c0_7, %c0_8] : memref<1x64xf32, #tpu.memory_space<vmem>>, vector<1x64xf32>
    %c0_9 = arith.constant 0 : index
    %c0_10 = arith.constant 0 : index
    %5 = vector.load %arg7[%c0_9, %c0_10] : memref<64x32xf32, #tpu.memory_space<vmem>>, vector<64x32xf32>
    %c0_11 = arith.constant 0 : index
    %c0_12 = arith.constant 0 : index
    %6 = vector.load %arg8[%c0_11, %c0_12] : memref<1x32xf32, #tpu.memory_space<vmem>>, vector<1x32xf32>
    %7 = arith.truncf %0 : vector<2x32xf32> to vector<2x32xbf16>
    %8 = arith.truncf %1 : vector<32x64xf32> to vector<32x64xbf16>
    %cst = arith.constant dense<0.000000e+00> : vector<2x64xf32>
    %9 = tpu.matmul %7, %8, %cst {dimension_numbers = #tpu.dot_dimension_numbers<[1], [0], [0], [1], [0, 0, 1, 1], [], []>} : vector<2x32xbf16>, vector<32x64xbf16>, vector<2x64xf32> -> vector<2x64xf32>
    %10 = vector.broadcast %2 : vector<1x64xf32> to vector<2x64xf32>
    %11 = arith.addf %9, %10 : vector<2x64xf32>
    %cst_13 = arith.constant dense<0.000000e+00> : vector<64xf32>
    %12 = vector.multi_reduction <add>, %11, %cst_13 [0] : vector<2x64xf32> to vector<64xf32>
    %13 = vector.shape_cast %12 : vector<64xf32> to vector<1x64xf32>
    %cst_14 = arith.constant 2.000000e+00 : f32
    %14 = vector.broadcast %cst_14 : f32 to vector<1x64xf32>
    %15 = arith.divf %13, %14 : vector<1x64xf32>
    %16 = vector.broadcast %15 : vector<1x64xf32> to vector<2x64xf32>
    %17 = arith.subf %11, %16 : vector<2x64xf32>
    %18 = arith.mulf %17, %17 : vector<2x64xf32>
    %cst_15 = arith.constant dense<0.000000e+00> : vector<64xf32>
    %19 = vector.multi_reduction <add>, %18, %cst_15 [0] : vector<2x64xf32> to vector<64xf32>
    %20 = vector.shape_cast %19 : vector<64xf32> to vector<1x64xf32>
    %cst_16 = arith.constant 2.000000e+00 : f32
    %21 = vector.broadcast %cst_16 : f32 to vector<1x64xf32>
    %22 = arith.divf %20, %21 : vector<1x64xf32>
    %23 = vector.broadcast %15 : vector<1x64xf32> to vector<2x64xf32>
    %24 = arith.subf %11, %23 : vector<2x64xf32>
    %cst_17 = arith.constant 9.99999974E-6 : f32
    %25 = vector.broadcast %cst_17 : f32 to vector<1x64xf32>
    %26 = arith.addf %22, %25 : vector<1x64xf32>
    %27 = math.rsqrt %26 : vector<1x64xf32>
    %28 = vector.broadcast %27 : vector<1x64xf32> to vector<2x64xf32>
    %29 = arith.mulf %24, %28 : vector<2x64xf32>
    %30 = vector.broadcast %3 : vector<1x64xf32> to vector<2x64xf32>
    %31 = arith.mulf %29, %30 : vector<2x64xf32>
    %32 = vector.broadcast %4 : vector<1x64xf32> to vector<2x64xf32>
    %33 = arith.addf %31, %32 : vector<2x64xf32>
    %cst_18 = arith.constant 0.000000e+00 : f32
    %34 = vector.broadcast %cst_18 : f32 to vector<2x64xf32>
    %35 = arith.maximumf %33, %34 : vector<2x64xf32>
    %36 = arith.truncf %35 : vector<2x64xf32> to vector<2x64xbf16>
    %37 = arith.truncf %5 : vector<64x32xf32> to vector<64x32xbf16>
    %cst_19 = arith.constant dense<0.000000e+00> : vector<2x32xf32>
    %38 = tpu.matmul %36, %37, %cst_19 {dimension_numbers = #tpu.dot_dimension_numbers<[1], [0], [0], [1], [0, 0, 1, 1], [], []>} : vector<2x64xbf16>, vector<64x32xbf16>, vector<2x32xf32> -> vector<2x32xf32>
    %39 = vector.broadcast %6 : vector<1x32xf32> to vector<2x32xf32>
    %40 = arith.addf %38, %39 : vector<2x32xf32>
    %c0_20 = arith.constant 0 : index
    %c0_21 = arith.constant 0 : index
    %41 = vector.load %arg2[%c0_20, %c0_21] : memref<2x32xf32, #tpu.memory_space<vmem>>, vector<2x32xf32>
    %c0_22 = arith.constant 0 : index
    %c0_23 = arith.constant 0 : index
    %42 = vector.load %arg9[%c0_22, %c0_23] : memref<32x64xf32, #tpu.memory_space<vmem>>, vector<32x64xf32>
    %c0_24 = arith.constant 0 : index
    %c0_25 = arith.constant 0 : index
    %43 = vector.load %arg10[%c0_24, %c0_25] : memref<1x64xf32, #tpu.memory_space<vmem>>, vector<1x64xf32>
    %c0_26 = arith.constant 0 : index
    %c0_27 = arith.constant 0 : index
    %44 = vector.load %arg11[%c0_26, %c0_27] : memref<1x64xf32, #tpu.memory_space<vmem>>, vector<1x64xf32>
    %c0_28 = arith.constant 0 : index
    %c0_29 = arith.constant 0 : index
    %45 = vector.load %arg12[%c0_28, %c0_29] : memref<1x64xf32, #tpu.memory_space<vmem>>, vector<1x64xf32>
    %c0_30 = arith.constant 0 : index
    %c0_31 = arith.constant 0 : index
    %46 = vector.load %arg13[%c0_30, %c0_31] : memref<64x32xf32, #tpu.memory_space<vmem>>, vector<64x32xf32>
    %c0_32 = arith.constant 0 : index
    %c0_33 = arith.constant 0 : index
    %47 = vector.load %arg14[%c0_32, %c0_33] : memref<1x32xf32, #tpu.memory_space<vmem>>, vector<1x32xf32>
    %48 = arith.truncf %41 : vector<2x32xf32> to vector<2x32xbf16>
    %49 = arith.truncf %42 : vector<32x64xf32> to vector<32x64xbf16>
    %cst_34 = arith.constant dense<0.000000e+00> : vector<2x64xf32>
    %50 = tpu.matmul %48, %49, %cst_34 {dimension_numbers = #tpu.dot_dimension_numbers<[1], [0], [0], [1], [0, 0, 1, 1], [], []>} : vector<2x32xbf16>, vector<32x64xbf16>, vector<2x64xf32> -> vector<2x64xf32>
    %51 = vector.broadcast %43 : vector<1x64xf32> to vector<2x64xf32>
    %52 = arith.addf %50, %51 : vector<2x64xf32>
    %cst_35 = arith.constant dense<0.000000e+00> : vector<64xf32>
    %53 = vector.multi_reduction <add>, %52, %cst_35 [0] : vector<2x64xf32> to vector<64xf32>
    %54 = vector.shape_cast %53 : vector<64xf32> to vector<1x64xf32>
    %cst_36 = arith.constant 2.000000e+00 : f32
    %55 = vector.broadcast %cst_36 : f32 to vector<1x64xf32>
    %56 = arith.divf %54, %55 : vector<1x64xf32>
    %57 = vector.broadcast %56 : vector<1x64xf32> to vector<2x64xf32>
    %58 = arith.subf %52, %57 : vector<2x64xf32>
    %59 = arith.mulf %58, %58 : vector<2x64xf32>
    %cst_37 = arith.constant dense<0.000000e+00> : vector<64xf32>
    %60 = vector.multi_reduction <add>, %59, %cst_37 [0] : vector<2x64xf32> to vector<64xf32>
    %61 = vector.shape_cast %60 : vector<64xf32> to vector<1x64xf32>
    %cst_38 = arith.constant 2.000000e+00 : f32
    %62 = vector.broadcast %cst_38 : f32 to vector<1x64xf32>
    %63 = arith.divf %61, %62 : vector<1x64xf32>
    %64 = vector.broadcast %56 : vector<1x64xf32> to vector<2x64xf32>
    %65 = arith.subf %52, %64 : vector<2x64xf32>
    %cst_39 = arith.constant 9.99999974E-6 : f32
    %66 = vector.broadcast %cst_39 : f32 to vector<1x64xf32>
    %67 = arith.addf %63, %66 : vector<1x64xf32>
    %68 = math.rsqrt %67 : vector<1x64xf32>
    %69 = vector.broadcast %68 : vector<1x64xf32> to vector<2x64xf32>
    %70 = arith.mulf %65, %69 : vector<2x64xf32>
    %71 = vector.broadcast %44 : vector<1x64xf32> to vector<2x64xf32>
    %72 = arith.mulf %70, %71 : vector<2x64xf32>
    %73 = vector.broadcast %45 : vector<1x64xf32> to vector<2x64xf32>
    %74 = arith.addf %72, %73 : vector<2x64xf32>
    %cst_40 = arith.constant 0.000000e+00 : f32
    %75 = vector.broadcast %cst_40 : f32 to vector<2x64xf32>
    %76 = arith.maximumf %74, %75 : vector<2x64xf32>
    %77 = arith.truncf %76 : vector<2x64xf32> to vector<2x64xbf16>
    %78 = arith.truncf %46 : vector<64x32xf32> to vector<64x32xbf16>
    %cst_41 = arith.constant dense<0.000000e+00> : vector<2x32xf32>
    %79 = tpu.matmul %77, %78, %cst_41 {dimension_numbers = #tpu.dot_dimension_numbers<[1], [0], [0], [1], [0, 0, 1, 1], [], []>} : vector<2x64xbf16>, vector<64x32xbf16>, vector<2x32xf32> -> vector<2x32xf32>
    %80 = vector.broadcast %47 : vector<1x32xf32> to vector<2x32xf32>
    %81 = arith.addf %79, %80 : vector<2x32xf32>
    %82 = arith.mulf %40, %40 : vector<2x32xf32>
    %cst_42 = arith.constant dense<0.000000e+00> : vector<2xf32>
    %83 = vector.multi_reduction <add>, %82, %cst_42 [1] : vector<2x32xf32> to vector<2xf32>
    %84 = vector.shape_cast %83 : vector<2xf32> to vector<2x1xf32>
    %cst_43 = arith.constant 1.000000e-24 : f32
    %85 = vector.broadcast %cst_43 : f32 to vector<2x1xf32>
    %86 = arith.maximumf %84, %85 : vector<2x1xf32>
    %87 = math.rsqrt %86 : vector<2x1xf32>
    %88 = vector.broadcast %87 : vector<2x1xf32> to vector<2x32xf32>
    %89 = arith.mulf %40, %88 : vector<2x32xf32>
    %90 = arith.mulf %81, %81 : vector<2x32xf32>
    %cst_44 = arith.constant dense<0.000000e+00> : vector<2xf32>
    %91 = vector.multi_reduction <add>, %90, %cst_44 [1] : vector<2x32xf32> to vector<2xf32>
    %92 = vector.shape_cast %91 : vector<2xf32> to vector<2x1xf32>
    %cst_45 = arith.constant 1.000000e-24 : f32
    %93 = vector.broadcast %cst_45 : f32 to vector<2x1xf32>
    %94 = arith.maximumf %92, %93 : vector<2x1xf32>
    %95 = math.rsqrt %94 : vector<2x1xf32>
    %96 = vector.broadcast %95 : vector<2x1xf32> to vector<2x32xf32>
    %97 = arith.mulf %81, %96 : vector<2x32xf32>
    %c0_46 = arith.constant 0 : index
    %c0_47 = arith.constant 0 : index
    %98 = memref.load %arg0[%c0_46, %c0_47] : memref<1x1xf32, #tpu.memory_space<smem>>
    %99 = vector.broadcast %98 : f32 to vector<2x32xf32>
    %100 = arith.mulf %89, %99 : vector<2x32xf32>
    %101 = vector.broadcast %98 : f32 to vector<2x32xf32>
    %102 = arith.mulf %97, %101 : vector<2x32xf32>
    %103 = arith.mulf %100, %97 : vector<2x32xf32>
    %cst_48 = arith.constant dense<0.000000e+00> : vector<2xf32>
    %104 = vector.multi_reduction <add>, %103, %cst_48 [1] : vector<2x32xf32> to vector<2xf32>
    %105 = vector.shape_cast %104 : vector<2xf32> to vector<2x1xf32>
    %106 = arith.truncf %100 : vector<2x32xf32> to vector<2x32xbf16>
    %107 = arith.truncf %97 : vector<2x32xf32> to vector<2x32xbf16>
    %cst_49 = arith.constant dense<0.000000e+00> : vector<2x2xf32>
    %108 = tpu.matmul %106, %107, %cst_49 {dimension_numbers = #tpu.dot_dimension_numbers<[1], [1], [0], [0], [0, 0, 1, 0], [], []>} : vector<2x32xbf16>, vector<2x32xbf16>, vector<2x2xf32> -> vector<2x2xf32>
    %cst_50 = arith.constant dense<0xFF800000> : vector<2xf32>
    %109 = vector.multi_reduction <maximumf>, %108, %cst_50 [1] : vector<2x2xf32> to vector<2xf32>
    %110 = vector.shape_cast %109 : vector<2xf32> to vector<2x1xf32>
    %111 = vector.broadcast %110 : vector<2x1xf32> to vector<2x2xf32>
    %112 = arith.subf %108, %111 : vector<2x2xf32>
    %113 = math.exp %112 : vector<2x2xf32>
    %cst_51 = arith.constant dense<0.000000e+00> : vector<2xf32>
    %114 = vector.multi_reduction <add>, %113, %cst_51 [1] : vector<2x2xf32> to vector<2xf32>
    %115 = vector.shape_cast %114 : vector<2xf32> to vector<2x1xf32>
    %116 = math.log %115 : vector<2x1xf32>
    %117 = arith.addf %116, %110 : vector<2x1xf32>
    %118 = arith.truncf %102 : vector<2x32xf32> to vector<2x32xbf16>
    %119 = arith.truncf %89 : vector<2x32xf32> to vector<2x32xbf16>
    %cst_52 = arith.constant dense<0.000000e+00> : vector<2x2xf32>
    %120 = tpu.matmul %118, %119, %cst_52 {dimension_numbers = #tpu.dot_dimension_numbers<[1], [1], [0], [0], [0, 0, 1, 0], [], []>} : vector<2x32xbf16>, vector<2x32xbf16>, vector<2x2xf32> -> vector<2x2xf32>
    %cst_53 = arith.constant dense<0xFF800000> : vector<2xf32>
    %121 = vector.multi_reduction <maximumf>, %120, %cst_53 [1] : vector<2x2xf32> to vector<2xf32>
    %122 = vector.shape_cast %121 : vector<2xf32> to vector<2x1xf32>
    %123 = vector.broadcast %122 : vector<2x1xf32> to vector<2x2xf32>
    %124 = arith.subf %120, %123 : vector<2x2xf32>
    %125 = math.exp %124 : vector<2x2xf32>
    %cst_54 = arith.constant dense<0.000000e+00> : vector<2xf32>
    %126 = vector.multi_reduction <add>, %125, %cst_54 [1] : vector<2x2xf32> to vector<2xf32>
    %127 = vector.shape_cast %126 : vector<2xf32> to vector<2x1xf32>
    %128 = math.log %127 : vector<2x1xf32>
    %129 = arith.addf %128, %122 : vector<2x1xf32>
    %130 = arith.subf %117, %105 : vector<2x1xf32>
    %cst_55 = arith.constant dense<0.000000e+00> : vector<1xf32>
    %131 = vector.multi_reduction <add>, %130, %cst_55 [0] : vector<2x1xf32> to vector<1xf32>
    %132 = vector.shape_cast %131 : vector<1xf32> to vector<1x1xf32>
    %cst_56 = arith.constant 2.000000e+00 : f32
    %133 = vector.broadcast %cst_56 : f32 to vector<1x1xf32>
    %134 = arith.divf %132, %133 : vector<1x1xf32>
    %135 = arith.subf %129, %105 : vector<2x1xf32>
    %cst_57 = arith.constant dense<0.000000e+00> : vector<1xf32>
    %136 = vector.multi_reduction <add>, %135, %cst_57 [0] : vector<2x1xf32> to vector<1xf32>
    %137 = vector.shape_cast %136 : vector<1xf32> to vector<1x1xf32>
    %cst_58 = arith.constant 2.000000e+00 : f32
    %138 = vector.broadcast %cst_58 : f32 to vector<1x1xf32>
    %139 = arith.divf %137, %138 : vector<1x1xf32>
    %140 = arith.addf %134, %139 : vector<1x1xf32>
    %cst_59 = arith.constant 5.000000e-01 : f32
    %141 = vector.broadcast %cst_59 : f32 to vector<1x1xf32>
    %142 = arith.mulf %141, %140 : vector<1x1xf32>
    %c0_60 = arith.constant 0 : index
    %c0_61 = arith.constant 0 : index
    %143 = vector.load %arg15[%c0_60, %c0_61] : memref<1x1xf32, #tpu.memory_space<vmem>>, vector<1x1xf32>
    tpu.vector_store %arg15[%c0_60, %c0_61], %142 {strides = array<i32>} : memref<1x1xf32, #tpu.memory_space<vmem>>, vector<1x1xf32>,
    return
  }
}

</mosaic_0001>

<llo_original>
// kernel: tpu_custom_call.1
$region0: #{tpu_custom_call.1}
  #allocation0 [shape = 'u32[]', space=smem, size = 0x4, offset = 0x4, fixed_abs, tag = 'smem constant byte address 0x4 - core index']
  #allocation1 [shape = 'u32[144,128]{1,0:T(1,128)}', space=vmem, size = 0x12000, scoped, tag = 'internal scratch']
  #allocation2 [shape = 'f32[1,1]{1,0:T(1,128)S(6)}', space=smem, size = 0x200, scoped, tag = 'scoped memory for tpu_custom_call.1']
  %s0 = inlined_call_operand.<no memory space> [shape: f32[1,1], index: 0, kind: input, shape index: {}]
  %s1 = inlined_call_operand.vmem [shape: f32[2,32], index: 1, kind: input, shape index: {}]
  %s2 = inlined_call_operand.vmem [shape: f32[2,32], index: 2, kind: input, shape index: {}]
  %s3 = inlined_call_operand.vmem [shape: f32[32,64], index: 3, kind: input, shape index: {}]
  %s4 = inlined_call_operand.vmem [shape: f32[1,64], index: 4, kind: input, shape index: {}]
  %s5 = inlined_call_operand.vmem [shape: f32[1,64], index: 5, kind: input, shape index: {}]
  %s6 = inlined_call_operand.vmem [shape: f32[1,64], index: 6, kind: input, shape index: {}]
  %s7 = inlined_call_operand.vmem [shape: f32[64,32], index: 7, kind: input, shape index: {}]
  %s8 = inlined_call_operand.vmem [shape: f32[1,32], index: 8, kind: input, shape index: {}]
  %s9 = inlined_call_operand.vmem [shape: f32[32,64], index: 9, kind: input, shape index: {}]
  %s10 = inlined_call_operand.vmem [shape: f32[1,64], index: 10, kind: input, shape index: {}]
  %s11 = inlined_call_operand.vmem [shape: f32[1,64], index: 11, kind: input, shape index: {}]
  %s12 = inlined_call_operand.vmem [shape: f32[1,64], index: 12, kind: input, shape index: {}]
  %s13 = inlined_call_operand.vmem [shape: f32[64,32], index: 13, kind: input, shape index: {}]
  %s14 = inlined_call_operand.vmem [shape: f32[1,32], index: 14, kind: input, shape index: {}]
  %s15 = inlined_call_operand.hbm [shape: f32[1,1], index: 15, kind: output, shape index: {}]
  %s16 = sld [smem:[#allocation0]]
  $region70: #{tpu_custom_call.1} parent=0
    _
  %s18 = ssub.s32 1, %s16
  %s19 = scalar_select 0, %s18, %s16
  %20 = sst [smem:[#allocation2]] %s0
  $region1: #{tpu_custom_call.1} parent=0
    #allocation3 [shape = 'u8[512]{0}', space=vmem, size = 0x400, scoped, tag = 'output window, operand 0, single buffered']
    #allocation4 [shape = 's32[1]{0}', space=sflag, size = 0x4, scoped, tag = 'scoped memory for tpu_custom_call.1']
    %21 = vsyncpa [#allocation4], 0
    // Predicated region
    $region2: #{tpu_custom_call.1} parent=1 // pred_check
      _
    $region3: #{tpu_custom_call.1} parent=1 // pred_check_branch
      %23 = sbr.rel (0) target = $region5
    $region4: #{tpu_custom_call.1} parent=1 // pred_region
      _
    $region5: #{tpu_custom_call.1} parent=1 // pred_fallthru
      _
    // Predicated region
    $region6: #{tpu_custom_call.1} parent=1 // pred_check
      _
    $region7: #{tpu_custom_call.1} parent=1 // pred_check_branch
      %25 = sbr.rel (0) target = $region9
    $region8: #{tpu_custom_call.1} parent=1 // pred_region
      _
    $region9: #{tpu_custom_call.1} parent=1 // pred_fallthru
      _
    // Predicated region
    $region10: #{tpu_custom_call.1} parent=1 // pred_check
      _
    $region11: #{tpu_custom_call.1} parent=1 // pred_check_branch
      %27 = sbr.rel (0) target = $region13
    $region12: #{tpu_custom_call.1} parent=1 // pred_region
      _
    $region13: #{tpu_custom_call.1} parent=1 // pred_fallthru
      _
    // Predicated region
    $region14: #{tpu_custom_call.1} parent=1 // pred_check
      _
    $region15: #{tpu_custom_call.1} parent=1 // pred_check_branch
      %29 = sbr.rel (0) target = $region17
    $region16: #{tpu_custom_call.1} parent=1 // pred_region
      _
    $region17: #{tpu_custom_call.1} parent=1 // pred_fallthru
      _
    // Predicated region
    $region18: #{tpu_custom_call.1} parent=1 // pred_check
      _
    $region19: #{tpu_custom_call.1} parent=1 // pred_check_branch
      %31 = sbr.rel (0) target = $region21
    $region20: #{tpu_custom_call.1} parent=1 // pred_region
      _
    $region21: #{tpu_custom_call.1} parent=1 // pred_fallthru
      _
    // Predicated region
    $region22: #{tpu_custom_call.1} parent=1 // pred_check
      _
    $region23: #{tpu_custom_call.1} parent=1 // pred_check_branch
      %33 = sbr.rel (0) target = $region25
    $region24: #{tpu_custom_call.1} parent=1 // pred_region
      _
    $region25: #{tpu_custom_call.1} parent=1 // pred_fallthru
      _
    // Predicated region
    $region26: #{tpu_custom_call.1} parent=1 // pred_check
      _
    $region27: #{tpu_custom_call.1} parent=1 // pred_check_branch
      %35 = sbr.rel (0) target = $region29
    $region28: #{tpu_custom_call.1} parent=1 // pred_region
      _
    $region29: #{tpu_custom_call.1} parent=1 // pred_fallthru
      _
    // Predicated region
    $region30: #{tpu_custom_call.1} parent=1 // pred_check
      _
    $region31: #{tpu_custom_call.1} parent=1 // pred_check_branch
      %37 = sbr.rel (0) target = $region33
    $region32: #{tpu_custom_call.1} parent=1 // pred_region
      _
    $region33: #{tpu_custom_call.1} parent=1 // pred_fallthru
      _
    // Predicated region
    $region34: #{tpu_custom_call.1} parent=1 // pred_check
      _
    $region35: #{tpu_custom_call.1} parent=1 // pred_check_branch
      %39 = sbr.rel (0) target = $region37
    $region36: #{tpu_custom_call.1} parent=1 // pred_region
      _
    $region37: #{tpu_custom_call.1} parent=1 // pred_fallthru
      _
    // Predicated region
    $region38: #{tpu_custom_call.1} parent=1 // pred_check
      _
    $region39: #{tpu_custom_call.1} parent=1 // pred_check_branch
      %41 = sbr.rel (0) target = $region41
    $region40: #{tpu_custom_call.1} parent=1 // pred_region
      _
    $region41: #{tpu_custom_call.1} parent=1 // pred_fallthru
      _
    // Predicated region
    $region42: #{tpu_custom_call.1} parent=1 // pred_check
      _
    $region43: #{tpu_custom_call.1} parent=1 // pred_check_branch
      %43 = sbr.rel (0) target = $region45
    $region44: #{tpu_custom_call.1} parent=1 // pred_region
      _
    $region45: #{tpu_custom_call.1} parent=1 // pred_fallthru
      _
    // Predicated region
    $region46: #{tpu_custom_call.1} parent=1 // pred_check
      _
    $region47: #{tpu_custom_call.1} parent=1 // pred_check_branch
      %45 = sbr.rel (0) target = $region49
    $region48: #{tpu_custom_call.1} parent=1 // pred_region
      _
    $region49: #{tpu_custom_call.1} parent=1 // pred_fallthru
      _
    // Predicated region
    $region50: #{tpu_custom_call.1} parent=1 // pred_check
      _
    $region51: #{tpu_custom_call.1} parent=1 // pred_check_branch
      %47 = sbr.rel (0) target = $region53
    $region52: #{tpu_custom_call.1} parent=1 // pred_region
      _
    $region53: #{tpu_custom_call.1} parent=1 // pred_fallthru
      _
    // Predicated region
    $region54: #{tpu_custom_call.1} parent=1 // pred_check
      _
    $region55: #{tpu_custom_call.1} parent=1 // pred_check_branch
      %49 = sbr.rel (0) target = $region57
    $region56: #{tpu_custom_call.1} parent=1 // pred_region
      _
    $region57: #{tpu_custom_call.1} parent=1 // pred_fallthru
      _
    // Predicated region
    $region58: #{tpu_custom_call.1} parent=1 // pred_check
      _
    $region59: #{tpu_custom_call.1} parent=1 // pred_check_branch
      %51 = sbr.rel (0) target = $region61
    $region60: #{tpu_custom_call.1} parent=1 // pred_region
      _
    $region61: #{tpu_custom_call.1} parent=1 // pred_fallthru
      _
    %v53 = vld [vmem:[%s1] sm:$0x3]
    %v54 = vld [vmem:[%s3] sm:$0xff]
    %v55 = vld [vmem:[%s3 + $0x8] sm:$0xff]
    %v56 = vld [vmem:[%s3 + $0x10] sm:$0xff]
    %v57 = vld [vmem:[%s3 + $0x18] sm:$0xff]
    %v58 = vld [vmem:[%s4] sm:$0x1]
    %v59 = vld [vmem:[%s5] sm:$0x1]
    %v60 = vld [vmem:[%s6] sm:$0x1]
    %v61 = vld [vmem:[%s7] sm:$0xff]
    %v62 = vld [vmem:[%s7 + $0x8] sm:$0xff]
    %v63 = vld [vmem:[%s7 + $0x10] sm:$0xff]
    %v64 = vld [vmem:[%s7 + $0x18] sm:$0xff]
    %v65 = vld [vmem:[%s7 + $0x20] sm:$0xff]
    %v66 = vld [vmem:[%s7 + $0x28] sm:$0xff]
    %v67 = vld [vmem:[%s7 + $0x30] sm:$0xff]
    %v68 = vld [vmem:[%s7 + $0x38] sm:$0xff]
    %v69 = vld [vmem:[%s8] sm:$0x1]
    %v70 = vpack.c.bf16 %v53, %v53
    %v71 = vpack.c.bf16 %v55, %v54
    %v72 = vpack.c.bf16 %v57, %v56
    %v74 = vlaneseq
    %v75 = vshrl.u32 %v74, 7
    %v76 = vsub.s32 0, %v75
    %v77 = vrot.slane %v58, %v76
    %vm79 = vcmask 261120
    %v81 = vsel %vm79, %v70, 0
    %83 = vmatprep.subr.bf16.mxu0 0
    %84 = vmatpush1.bf16.msra.mxu0 0
    %85 = vmatprep.subr.bf16.mxu0 0
    %86 = vmatpush1.bf16.msra.mxu0 0
    %87 = vmatprep.subr.bf16.mxu0 0
    %88 = vmatpush1.bf16.msra.mxu0 0
    %89 = vmatprep.subr.bf16.mxu0 0
    %90 = vmatpush1.bf16.msra.mxu0 0
    %91 = vmatprep.subr.bf16.mxu0 0
    %92 = vmatpush1.bf16.msra.mxu0 0
    %93 = vmatprep.subr.bf16.mxu0 0
    %94 = vmatpush1.bf16.msra.mxu0 0
    %95 = vmatprep.subr.bf16.mxu0 0
    %96 = vmatpush1.bf16.msra.mxu0 %v72
    %97 = vmatprep.subr.bf16.mxu0 0
    %98 = vmatpush1.bf16.msra.mxu0 %v71
    %99 = vmatprep.subr.bf16.mxu0 0
    %100 = vmatpush2.bf16.msra.mxu0 0
    %101 = vmatprep.subr.bf16.mxu0 0
    %102 = vmatpush2.bf16.msra.mxu0 0
    %103 = vmatprep.subr.bf16.mxu0 0
    %104 = vmatpush2.bf16.msra.mxu0 0
    %105 = vmatprep.subr.bf16.mxu0 0
    %106 = vmatpush2.bf16.msra.mxu0 0
    %107 = vmatprep.subr.bf16.mxu0 0
    %108 = vmatpush2.bf16.msra.mxu0 0
    %109 = vmatprep.subr.bf16.mxu0 0
    %110 = vmatpush2.bf16.msra.mxu0 0
    %111 = vmatprep.subr.bf16.mxu0 0
    %112 = vmatpush2.bf16.msra.mxu0 0
    %113 = vmatprep.subr.bf16.mxu0 0
    %114 = vmatpush2.bf16.msra.mxu0 0
    %115 = vmatprep.mubr.bf16.mxu0 0
    %116 = vmatmul.mubr.bf16.gmra.mxu0 %v81
    %v117 = vpop.f32.mrf.mxu0
    %v118 = vadd.f32 %v77, %v117
    %v119 = vpop.f32.mrf.mxu0
    %v120 = vpop.f32.mrf.mxu0
    %v121 = vpop.f32.mrf.mxu0
    %122 = vdwg.mxu0
    %vm123 = vcmask 517120
    %v124 = vsel %vm123, %v118, 0.0
    %v125 = vrot.slane %v124, 4
    %v126 = vadd.f32 %v124, %v125
    %v127 = vrot.slane %v126, 2
    %v128 = vadd.f32 %v126, %v127
    %v129 = vrot.slane %v128, 1
    %v130 = vadd.f32 %v128, %v129
    %v131 = vrcp.pop 2.0
    %v132 = vmul.f32 %v130, %v131
    %v133 = vsub.f32 %v118, %v132
    %v134 = vmul.f32 %v133, %v133
    %v135 = vsel %vm123, %v134, 0.0
    %v136 = vrot.slane %v135, 4
    %v137 = vadd.f32 %v135, %v136
    %v138 = vrot.slane %v137, 2
    %v139 = vadd.f32 %v137, %v138
    %v140 = vrot.slane %v139, 1
    %v141 = vadd.f32 %v139, %v140
    %v142 = vmul.f32 %v141, %v131
    %v143 = vadd.f32 %v142, 1e-05
    %v144 = vrsqrt.pop %v143
    %v145 = vmul.f32 %v133, %v144
    %v147 = vlaneseq
    %v148 = vshrl.u32 %v147, 7
    %v149 = vsub.s32 0, %v148
    %v150 = vrot.slane %v59, %v149
    %v152 = vmul.f32 %v145, %v150
    %v154 = vlaneseq
    %v155 = vshrl.u32 %v154, 7
    %v156 = vsub.s32 0, %v155
    %v157 = vrot.slane %v60, %v156
    %v159 = vadd.f32 %v152, %v157
    %v160 = vmax.f32 %v159, 0.0
    %v161 = vpack.c.bf16 %v160, %v160
    %v162 = vpack.c.bf16 %v62, %v61
    %v163 = vpack.c.bf16 %v64, %v63
    %v164 = vpack.c.bf16 %v66, %v65
    %v165 = vpack.c.bf16 %v68, %v67
    %v167 = vlaneseq
    %v168 = vshrl.u32 %v167, 7
    %v169 = vsub.s32 0, %v168
    %v170 = vrot.slane %v69, %v169
    %vm172 = vcmask 523264
    %v174 = vsel %vm172, %v161, 0
    %176 = vmatprep.subr.bf16.mxu0 0
    %177 = vmatpush1.bf16.msra.mxu0 0
    %178 = vmatprep.subr.bf16.mxu0 0
    %179 = vmatpush1.bf16.msra.mxu0 0
    %180 = vmatprep.subr.bf16.mxu0 0
    %181 = vmatpush1.bf16.msra.mxu0 0
    %182 = vmatprep.subr.bf16.mxu0 0
    %183 = vmatpush1.bf16.msra.mxu0 0
    %184 = vmatprep.subr.bf16.mxu0 0
    %185 = vmatpush1.bf16.msra.mxu0 %v165
    %186 = vmatprep.subr.bf16.mxu0 0
    %187 = vmatpush1.bf16.msra.mxu0 %v164
    %188 = vmatprep.subr.bf16.mxu0 0
    %189 = vmatpush1.bf16.msra.mxu0 %v163
    %190 = vmatprep.subr.bf16.mxu0 0
    %191 = vmatpush1.bf16.msra.mxu0 %v162
    %192 = vmatprep.subr.bf16.mxu0 0
    %193 = vmatpush2.bf16.msra.mxu0 0
    %194 = vmatprep.subr.bf16.mxu0 0
    %195 = vmatpush2.bf16.msra.mxu0 0
    %196 = vmatprep.subr.bf16.mxu0 0
    %197 = vmatpush2.bf16.msra.mxu0 0
    %198 = vmatprep.subr.bf16.mxu0 0
    %199 = vmatpush2.bf16.msra.mxu0 0
    %200 = vmatprep.subr.bf16.mxu0 0
    %201 = vmatpush2.bf16.msra.mxu0 0
    %202 = vmatprep.subr.bf16.mxu0 0
    %203 = vmatpush2.bf16.msra.mxu0 0
    %204 = vmatprep.subr.bf16.mxu0 0
    %205 = vmatpush2.bf16.msra.mxu0 0
    %206 = vmatprep.subr.bf16.mxu0 0
    %207 = vmatpush2.bf16.msra.mxu0 0
    %208 = vmatprep.mubr.bf16.mxu0 0
    %209 = vmatmul.mubr.bf16.gmra.mxu0 %v174
    %v210 = vpop.f32.mrf.mxu0
    %v211 = vadd.f32 %v170, %v210
    %v212 = vpop.f32.mrf.mxu0
    %v213 = vpop.f32.mrf.mxu0
    %v214 = vpop.f32.mrf.mxu0
    %215 = vdwg.mxu0
    %v216 = vld [vmem:[%s2] sm:$0x3]
    %v217 = vld [vmem:[%s9] sm:$0xff]
    %v218 = vld [vmem:[%s9 + $0x8] sm:$0xff]
    %v219 = vld [vmem:[%s9 + $0x10] sm:$0xff]
    %v220 = vld [vmem:[%s9 + $0x18] sm:$0xff]
    %v221 = vld [vmem:[%s10] sm:$0x1]
    %v222 = vld [vmem:[%s11] sm:$0x1]
    %v223 = vld [vmem:[%s12] sm:$0x1]
    %v224 = vld [vmem:[%s13] sm:$0xff]
    %v225 = vld [vmem:[%s13 + $0x8] sm:$0xff]
    %v226 = vld [vmem:[%s13 + $0x10] sm:$0xff]
    %v227 = vld [vmem:[%s13 + $0x18] sm:$0xff]
    %v228 = vld [vmem:[%s13 + $0x20] sm:$0xff]
    %v229 = vld [vmem:[%s13 + $0x28] sm:$0xff]
    %v230 = vld [vmem:[%s13 + $0x30] sm:$0xff]
    %v231 = vld [vmem:[%s13 + $0x38] sm:$0xff]
    %v232 = vld [vmem:[%s14] sm:$0x1]
    %v233 = vpack.c.bf16 %v216, %v216
    %v234 = vpack.c.bf16 %v218, %v217
    %v235 = vpack.c.bf16 %v220, %v219
    %v237 = vlaneseq
    %v238 = vshrl.u32 %v237, 7
    %v239 = vsub.s32 0, %v238
    %v240 = vrot.slane %v221, %v239
    %v243 = vsel %vm79, %v233, 0
    %245 = vmatprep.subr.bf16.mxu0 0
    %246 = vmatpush1.bf16.msra.mxu0 0
    %247 = vmatprep.subr.bf16.mxu0 0
    %248 = vmatpush1.bf16.msra.mxu0 0
    %249 = vmatprep.subr.bf16.mxu0 0
    %250 = vmatpush1.bf16.msra.mxu0 0
    %251 = vmatprep.subr.bf16.mxu0 0
    %252 = vmatpush1.bf16.msra.mxu0 0
    %253 = vmatprep.subr.bf16.mxu0 0
    %254 = vmatpush1.bf16.msra.mxu0 0
    %255 = vmatprep.subr.bf16.mxu0 0
    %256 = vmatpush1.bf16.msra.mxu0 0
    %257 = vmatprep.subr.bf16.mxu0 0
    %258 = vmatpush1.bf16.msra.mxu0 %v235
    %259 = vmatprep.subr.bf16.mxu0 0
    %260 = vmatpush1.bf16.msra.mxu0 %v234
    %261 = vmatprep.subr.bf16.mxu0 0
    %262 = vmatpush2.bf16.msra.mxu0 0
    %263 = vmatprep.subr.bf16.mxu0 0
    %264 = vmatpush2.bf16.msra.mxu0 0
    %265 = vmatprep.subr.bf16.mxu0 0
    %266 = vmatpush2.bf16.msra.mxu0 0
    %267 = vmatprep.subr.bf16.mxu0 0
    %268 = vmatpush2.bf16.msra.mxu0 0
    %269 = vmatprep.subr.bf16.mxu0 0
    %270 = vmatpush2.bf16.msra.mxu0 0
    %271 = vmatprep.subr.bf16.mxu0 0
    %272 = vmatpush2.bf16.msra.mxu0 0
    %273 = vmatprep.subr.bf16.mxu0 0
    %274 = vmatpush2.bf16.msra.mxu0 0
    %275 = vmatprep.subr.bf16.mxu0 0
    %276 = vmatpush2.bf16.msra.mxu0 0
    %277 = vmatprep.mubr.bf16.mxu0 0
    %278 = vmatmul.mubr.bf16.gmra.mxu0 %v243
    %v279 = vpop.f32.mrf.mxu0
    %v280 = vadd.f32 %v240, %v279
    %v281 = vpop.f32.mrf.mxu0
    %v282 = vpop.f32.mrf.mxu0
    %v283 = vpop.f32.mrf.mxu0
    %284 = vdwg.mxu0
    %v285 = vsel %vm123, %v280, 0.0
    %v286 = vrot.slane %v285, 4
    %v287 = vadd.f32 %v285, %v286
    %v288 = vrot.slane %v287, 2
    %v289 = vadd.f32 %v287, %v288
    %v290 = vrot.slane %v289, 1
    %v291 = vadd.f32 %v289, %v290
    %v292 = vmul.f32 %v291, %v131
    %v293 = vsub.f32 %v280, %v292
    %v294 = vmul.f32 %v293, %v293
    %v295 = vsel %vm123, %v294, 0.0
    %v296 = vrot.slane %v295, 4
    %v297 = vadd.f32 %v295, %v296
    %v298 = vrot.slane %v297, 2
    %v299 = vadd.f32 %v297, %v298
    %v300 = vrot.slane %v299, 1
    %v301 = vadd.f32 %v299, %v300
    %v302 = vmul.f32 %v301, %v131
    %v303 = vadd.f32 %v302, 1e-05
    %v304 = vrsqrt.pop %v303
    %v305 = vmul.f32 %v293, %v304
    %v307 = vlaneseq
    %v308 = vshrl.u32 %v307, 7
    %v309 = vsub.s32 0, %v308
    %v310 = vrot.slane %v222, %v309
    %v312 = vmul.f32 %v305, %v310
    %v314 = vlaneseq
    %v315 = vshrl.u32 %v314, 7
    %v316 = vsub.s32 0, %v315
    %v317 = vrot.slane %v223, %v316
    %v319 = vadd.f32 %v312, %v317
    %v320 = vmax.f32 %v319, 0.0
    %v321 = vpack.c.bf16 %v320, %v320
    %v322 = vpack.c.bf16 %v225, %v224
    %v323 = vpack.c.bf16 %v227, %v226
    %v324 = vpack.c.bf16 %v229, %v228
    %v325 = vpack.c.bf16 %v231, %v230
    %v327 = vlaneseq
    %v328 = vshrl.u32 %v327, 7
    %v329 = vsub.s32 0, %v328
    %v330 = vrot.slane %v232, %v329
    %v333 = vsel %vm172, %v321, 0
    %335 = vmatprep.subr.bf16.mxu0 0
    %336 = vmatpush1.bf16.msra.mxu0 0
    %337 = vmatprep.subr.bf16.mxu0 0
    %338 = vmatpush1.bf16.msra.mxu0 0
    %339 = vmatprep.subr.bf16.mxu0 0
    %340 = vmatpush1.bf16.msra.mxu0 0
    %341 = vmatprep.subr.bf16.mxu0 0
    %342 = vmatpush1.bf16.msra.mxu0 0
    %343 = vmatprep.subr.bf16.mxu0 0
    %344 = vmatpush1.bf16.msra.mxu0 %v325
    %345 = vmatprep.subr.bf16.mxu0 0
    %346 = vmatpush1.bf16.msra.mxu0 %v324
    %347 = vmatprep.subr.bf16.mxu0 0
    %348 = vmatpush1.bf16.msra.mxu0 %v323
    %349 = vmatprep.subr.bf16.mxu0 0
    %350 = vmatpush1.bf16.msra.mxu0 %v322
    %351 = vmatprep.subr.bf16.mxu0 0
    %352 = vmatpush2.bf16.msra.mxu0 0
    %353 = vmatprep.subr.bf16.mxu0 0
    %354 = vmatpush2.bf16.msra.mxu0 0
    %355 = vmatprep.subr.bf16.mxu0 0
    %356 = vmatpush2.bf16.msra.mxu0 0
    %357 = vmatprep.subr.bf16.mxu0 0
    %358 = vmatpush2.bf16.msra.mxu0 0
    %359 = vmatprep.subr.bf16.mxu0 0
    %360 = vmatpush2.bf16.msra.mxu0 0
    %361 = vmatprep.subr.bf16.mxu0 0
    %362 = vmatpush2.bf16.msra.mxu0 0
    %363 = vmatprep.subr.bf16.mxu0 0
    %364 = vmatpush2.bf16.msra.mxu0 0
    %365 = vmatprep.subr.bf16.mxu0 0
    %366 = vmatpush2.bf16.msra.mxu0 0
    %367 = vmatprep.mubr.bf16.mxu0 0
    %368 = vmatmul.mubr.bf16.gmra.mxu0 %v333
    %v369 = vpop.f32.mrf.mxu0
    %v370 = vadd.f32 %v330, %v369
    %v371 = vpop.f32.mrf.mxu0
    %v372 = vpop.f32.mrf.mxu0
    %v373 = vpop.f32.mrf.mxu0
    %374 = vdwg.mxu0
    %v375 = vmul.f32 %v211, %v211
    %vm376 = vcmask 254976
    %v377 = vsel %vm376, %v375, 0.0
    %378 = vadd.xlane.f32.xlu0 %v377
    %v379 = vpop.xlane.xlu0 %378
    %v380 = vmax.f32 %v379, 1e-24
    %v381 = vrsqrt.pop %v380
    %v382 = vmul.f32 %v211, %v381
    %v383 = vmul.f32 %v370, %v370
    %v384 = vsel %vm376, %v383, 0.0
    %385 = vadd.xlane.f32.xlu0 %v384
    %v386 = vpop.xlane.xlu0 %385
    %v387 = vmax.f32 %v386, 1e-24
    %v388 = vrsqrt.pop %v387
    %v389 = vmul.f32 %v370, %v388
    %s390 = sld [smem:[#allocation2]]
    %v391 = vstv %s390
    %v392 = vmul.f32 %v382, %v391
    %v393 = vmul.f32 %v389, %v391
    %v394 = vmul.f32 %v392, %v389
    %v395 = vsel %vm376, %v394, 0.0
    %396 = vadd.xlane.f32.xlu0 %v395
    %v397 = vpop.xlane.xlu0 %396
    %v398 = vpack.c.bf16 %v392, %v392
    %v399 = vpack.c.bf16 %v389, %v389
    %v401 = vsel %vm79, %v398, 0
    %v404 = vsel %vm79, %v399, 0
    %406 = vmatprep.subr.bf16.mxu0 0
    %407 = vmatpush1.bf16.xpose.msra.mxu0 0
    %408 = vmatprep.subr.bf16.mxu0 0
    %409 = vmatpush1.bf16.xpose.msra.mxu0 0
    %410 = vmatprep.subr.bf16.mxu0 0
    %411 = vmatpush1.bf16.xpose.msra.mxu0 0
    %412 = vmatprep.subr.bf16.mxu0 0
    %413 = vmatpush1.bf16.xpose.msra.mxu0 0
    %414 = vmatprep.subr.bf16.mxu0 0
    %415 = vmatpush1.bf16.xpose.msra.mxu0 0
    %416 = vmatprep.subr.bf16.mxu0 0
    %417 = vmatpush1.bf16.xpose.msra.mxu0 0
    %418 = vmatprep.subr.bf16.mxu0 0
    %419 = vmatpush1.bf16.xpose.msra.mxu0 0
    %420 = vmatprep.subr.bf16.mxu0 0
    %421 = vmatpush1.bf16.xpose.msra.mxu0 %v404
    %422 = vmatprep.subr.bf16.mxu0 0
    %423 = vmatpush2.bf16.xpose.msra.mxu0 0
    %424 = vmatprep.subr.bf16.mxu0 0
    %425 = vmatpush2.bf16.xpose.msra.mxu0 0
    %426 = vmatprep.subr.bf16.mxu0 0
    %427 = vmatpush2.bf16.xpose.msra.mxu0 0
    %428 = vmatprep.subr.bf16.mxu0 0
    %429 = vmatpush2.bf16.xpose.msra.mxu0 0
    %430 = vmatprep.subr.bf16.mxu0 0
    %431 = vmatpush2.bf16.xpose.msra.mxu0 0
    %432 = vmatprep.subr.bf16.mxu0 0
    %433 = vmatpush2.bf16.xpose.msra.mxu0 0
    %434 = vmatprep.subr.bf16.mxu0 0
    %435 = vmatpush2.bf16.xpose.msra.mxu0 0
    %436 = vmatprep.subr.bf16.mxu0 0
    %437 = vmatpush2.bf16.xpose.msra.mxu0 0
    %438 = vmatprep.mubr.bf16.mxu0 0
    %439 = vmatmul.mubr.bf16.gmra.mxu0 %v401
    %v440 = vpop.f32.mrf.mxu0
    %v441 = vadd.f32 0.0, %v440
    %v442 = vpop.f32.mrf.mxu0
    %v443 = vpop.f32.mrf.mxu0
    %v444 = vpop.f32.mrf.mxu0
    %445 = vdwg.mxu0
    %vm446 = vcmask 9216
    %v447 = vsel %vm446, %v441, -inf
    %448 = vmax.xlane.f32.xlu0 %v447
    %v449 = vpop.xlane.xlu0 %448
    %v450 = vsub.f32 %v441, %v449
    %v451 = vmul.f32 %v450, 1.442695
    %v452 = vpow.pop %v451
    %v453 = vsel %vm446, %v452, 0.0
    %454 = vadd.xlane.f32.xlu0 %v453
    %v455 = vpop.xlane.xlu0 %454
    %v456 = vlog2.pop %v455
    %v457 = vmul.f32 %v456, 0.6931472
    %v458 = vadd.f32 %v457, %v449
    %v459 = vpack.c.bf16 %v393, %v393
    %v460 = vpack.c.bf16 %v382, %v382
    %v462 = vsel %vm79, %v459, 0
    %v465 = vsel %vm79, %v460, 0
    %467 = vmatprep.subr.bf16.mxu0 0
    %468 = vmatpush1.bf16.xpose.msra.mxu0 0
    %469 = vmatprep.subr.bf16.mxu0 0
    %470 = vmatpush1.bf16.xpose.msra.mxu0 0
    %471 = vmatprep.subr.bf16.mxu0 0
    %472 = vmatpush1.bf16.xpose.msra.mxu0 0
    %473 = vmatprep.subr.bf16.mxu0 0
    %474 = vmatpush1.bf16.xpose.msra.mxu0 0
    %475 = vmatprep.subr.bf16.mxu0 0
    %476 = vmatpush1.bf16.xpose.msra.mxu0 0
    %477 = vmatprep.subr.bf16.mxu0 0
    %478 = vmatpush1.bf16.xpose.msra.mxu0 0
    %479 = vmatprep.subr.bf16.mxu0 0
    %480 = vmatpush1.bf16.xpose.msra.mxu0 0
    %481 = vmatprep.subr.bf16.mxu0 0
    %482 = vmatpush1.bf16.xpose.msra.mxu0 %v465
    %483 = vmatprep.subr.bf16.mxu0 0
    %484 = vmatpush2.bf16.xpose.msra.mxu0 0
    %485 = vmatprep.subr.bf16.mxu0 0
    %486 = vmatpush2.bf16.xpose.msra.mxu0 0
    %487 = vmatprep.subr.bf16.mxu0 0
    %488 = vmatpush2.bf16.xpose.msra.mxu0 0
    %489 = vmatprep.subr.bf16.mxu0 0
    %490 = vmatpush2.bf16.xpose.msra.mxu0 0
    %491 = vmatprep.subr.bf16.mxu0 0
    %492 = vmatpush2.bf16.xpose.msra.mxu0 0
    %493 = vmatprep.subr.bf16.mxu0 0
    %494 = vmatpush2.bf16.xpose.msra.mxu0 0
    %495 = vmatprep.subr.bf16.mxu0 0
    %496 = vmatpush2.bf16.xpose.msra.mxu0 0
    %497 = vmatprep.subr.bf16.mxu0 0
    %498 = vmatpush2.bf16.xpose.msra.mxu0 0
    %499 = vmatprep.mubr.bf16.mxu0 0
    %500 = vmatmul.mubr.bf16.gmra.mxu0 %v462
    %v501 = vpop.f32.mrf.mxu0
    %v502 = vadd.f32 0.0, %v501
    %v503 = vpop.f32.mrf.mxu0
    %v504 = vpop.f32.mrf.mxu0
    %v505 = vpop.f32.mrf.mxu0
    %506 = vdwg.mxu0
    %v507 = vsel %vm446, %v502, -inf
    %508 = vmax.xlane.f32.xlu0 %v507
    %v509 = vpop.xlane.xlu0 %508
    %v510 = vsub.f32 %v502, %v509
    %v511 = vmul.f32 %v510, 1.442695
    %v512 = vpow.pop %v511
    %v513 = vsel %vm446, %v512, 0.0
    %514 = vadd.xlane.f32.xlu0 %v513
    %v515 = vpop.xlane.xlu0 %514
    %v516 = vlog2.pop %v515
    %v517 = vmul.f32 %v516, 0.6931472
    %v518 = vadd.f32 %v517, %v509
    %v519 = vsub.f32 %v458, %v397
    %vm520 = vcmask 1041408
    %v521 = vsel %vm520, %v519, 0.0
    %v522 = vrot.slane %v521, 4
    %v523 = vadd.f32 %v521, %v522
    %v524 = vrot.slane %v523, 2
    %v525 = vadd.f32 %v523, %v524
    %v526 = vrot.slane %v525, 1
    %v527 = vadd.f32 %v525, %v526
    %v528 = vmul.f32 %v527, %v131
    %v529 = vsub.f32 %v518, %v397
    %v530 = vsel %vm520, %v529, 0.0
    %v531 = vrot.slane %v530, 4
    %v532 = vadd.f32 %v530, %v531
    %v533 = vrot.slane %v532, 2
    %v534 = vadd.f32 %v532, %v533
    %v535 = vrot.slane %v534, 1
    %v536 = vadd.f32 %v534, %v535
    %v537 = vmul.f32 %v536, %v131
    %v538 = vadd.f32 %v528, %v537
    %v539 = vmul.f32 %v538, 0.5
    %vm540 = vcmask 0
    %541 = vst.msk [vmem:[#allocation3] sm:$0x1] %vm540, %v539
    // Predicated region
    $region62: #{tpu_custom_call.1} parent=1 // pred_check
      _
    $region63: #{tpu_custom_call.1} parent=1 // pred_check_branch
      %543 = sbr.rel (0) target = $region65
    $region64: #{tpu_custom_call.1} parent=1 // pred_region
      %s545 = ssub.s32 16, 16
      %546 = vsyncadd [#allocation4], %s545
      %s548 = sshll.u32 [#allocation3], 4
      %s549 = int_to_ptr.vmem [resolvable:$true] %s548
      %551 = dma.vmem_to_hbm [thread:$0]  %s549, 16, %s15, [#allocation4]
    $region65: #{tpu_custom_call.1} parent=1 // pred_fallthru
      _
    // Predicated region
    $region66: #{tpu_custom_call.1} parent=1 // pred_check
      _
    $region67: #{tpu_custom_call.1} parent=1 // pred_check_branch
      %553 = sbr.rel (0) target = $region69
    $region68: #{tpu_custom_call.1} parent=1 // pred_region
      %554 = dma.done [#allocation4], 16
    $region69: #{tpu_custom_call.1} parent=1 // pred_fallthru
      _
    %555 = vsyncpa [#allocation4], 1

</llo_original>
